<compile_context>
chip_gen: v7x
topology: tpu7x:2x2x1
jax: 0.10.0
libtpu: 0.0.40
codegen_flags: <defaults>
</compile_context>

<pallas_src>
import functools
import math

import jax
import jax.numpy as jnp
from jax.experimental import pallas as pl
from jax.experimental.pallas import tpu as pltpu

# Hard cap on spatial columns per grid step (multiple of 128).
_MAX_TILE = 128 * 1024

_PT_MIN = 1e-6
_PT_MAX = 0.999999
_LOG_PT_MIN = math.log(_PT_MIN)
_LOG_PT_MAX = math.log(_PT_MAX)


def _focal_loss_kernel(x_ref, t_ref, o_ref, acc_ref, *,
                       n_class, gamma, alpha, hw, tile):
    """One (batch, spatial-tile) step.

    x_ref:  (1, n_class, tile)  logits
    t_ref:  (1, 1, tile)        int32 class labels
    o_ref:  (1, 1, 128)         per-batch partial loss (written at last tile)
    acc_ref:(1, tile) f32       running per-lane loss accumulator (VPU only)
    """
    j = pl.program_id(1)

    @pl.when(j == 0)
    def _():
        acc_ref[...] = jnp.zeros_like(acc_ref)

    logits = x_ref[0].astype(jnp.float32)            # (C, T)
    tgt = t_ref[0]                                   # (1, T) int32

    # Numerically stable softmax over the (small) class axis.
    m = jnp.max(logits, axis=0, keepdims=True)       # (1, T)  XLU sublane reduce
    shifted = logits - m                             # (C, T)
    e = jnp.exp(shifted)                             # (C, T)  EUP
    denom = jnp.sum(e, axis=0, keepdims=True)        # (1, T)  XLU sublane reduce
    inv_denom = 1.0 / denom                          # (1, T)
    log_denom = jnp.log(denom)                       # (1, T)  single EUP log

    # pt clipped in prob-space; log(pt) clipped in log-space (identical result,
    # avoids n_class full-tile EUP logs).
    pt = jnp.clip(e * inv_denom, _PT_MIN, _PT_MAX)                      # (C, T)
    log_pt = jnp.clip(shifted - log_denom, _LOG_PT_MIN, _LOG_PT_MAX)    # (C, T)
    focal = (1.0 - pt) ** gamma * log_pt                                # (C, T)

    # Unrolled class-select (n_class small & static): pure elementwise VPU.
    loss = jnp.zeros(tgt.shape, jnp.float32)         # (1, T)
    for i in range(n_class):
        loss = loss + jnp.where(tgt == i, (-alpha[i]) * focal[i:i + 1, :], 0.0)

    # Mask out-of-range spatial columns in the (possibly partial) last tile.
    col = jax.lax.broadcasted_iota(jnp.int32, tgt.shape, 1) + j * tile
    loss = jnp.where(col < hw, loss, 0.0)

    acc_ref[...] = acc_ref[...] + loss               # elementwise accumulate

    @pl.when(j == pl.num_programs(1) - 1)
    def _():
        total = jnp.sum(acc_ref[...])                # single XLU reduce per batch
        o_ref[...] = jnp.full_like(o_ref, total)


def _pick_tile(hw, n_class, max_tile):
    """Largest 128-multiple tile keeping double-buffered input blocks in VMEM."""
    budget_bytes = 8 * 1024 * 1024                 # for the 2x-buffered input blocks
    per_col_bytes = 4 * (n_class + 1)              # f32 logits rows + i32 target
    cap = (budget_bytes // (2 * per_col_bytes)) // 128 * 128
    limit = max(128, min(max_tile, cap))
    if hw <= limit:
        return hw, 1                               # full extent: always a legal block
    return limit, pl.cdiv(hw, limit)


def focal_loss(logits, target, *, gamma=2, alpha=(0.5, 0.5), n_class=2,
               reduction="mean", max_tile=_MAX_TILE):
    """Pallas TPU FocalLoss.  logits: (B, n_class, H, W); target: (B, H, W) ints."""
    B, C, H, W = logits.shape
    assert C == n_class == len(alpha), "channel dim must equal n_class / len(alpha)"
    assert target.shape == (B, H, W), "target must be (B, H, W)"
    assert reduction in ("mean", "sum"), "only 'mean'/'sum' supported"
    # TODO(synk): reduction='none' (per-pixel loss map output) is not implemented.

    hw = H * W
    n_pixels = B * hw
    tile, n_j = _pick_tile(hw, n_class, max_tile)

    # Contiguity-preserving reshapes only — no transpose / pad / f32 upcast pass.
    x3 = logits.reshape(B, C, hw)
    t3 = target.reshape(B, 1, hw).astype(jnp.int32)

    kernel = functools.partial(
        _focal_loss_kernel,
        n_class=n_class,
        gamma=gamma,
        alpha=tuple(float(a) for a in alpha),
        hw=hw,
        tile=tile,
    )

    partials = pl.pallas_call(
        kernel,
        out_shape=jax.ShapeDtypeStruct((B, 1, 128), jnp.float32),
        grid_spec=pltpu.PrefetchScalarGridSpec(
            num_scalar_prefetch=0,
            grid=(B, n_j),
            in_specs=[
                pl.BlockSpec((1, C, tile), lambda b, j: (b, 0, j)),
                pl.BlockSpec((1, 1, tile), lambda b, j: (b, 0, j)),
            ],
            out_specs=pl.BlockSpec((1, 1, 128), lambda b, j: (b, 0, 0)),
            scratch_shapes=[pltpu.VMEM((1, tile), jnp.float32)],
        ),
        compiler_params=pltpu.CompilerParams(
            dimension_semantics=("parallel", "arbitrary"),
            vmem_limit_bytes=32 * 1024 * 1024,
        ),
    )(x3, t3)

    total = jnp.sum(partials[:, 0, 0])
    if reduction == "mean":
        return total / float(n_pixels)
    return total


class FocalLoss:
    """Mirror of the PyTorch FocalLoss module (device arg ignored)."""

    def __init__(self, gamma=2, alpha=(0.5, 0.5), n_class=2, reduction="mean",
                 device=None):
        self.gamma = gamma
        self.alpha = tuple(float(a) for a in alpha)
        self.n_class = n_class
        self.reduction = reduction

    def __call__(self, input, target):
        return focal_loss(input, target, gamma=self.gamma, alpha=self.alpha,
                          n_class=self.n_class, reduction=self.reduction)


def _reference(x, t, gamma, alpha, n_class, reduction):
    """Plain-JAX mirror of the PyTorch forward."""
    pt = jax.nn.softmax(x, axis=1)
    pt = jnp.clip(pt, _PT_MIN, _PT_MAX)
    loss = jnp.zeros(t.shape, jnp.float32)
    for i in range(n_class):
        loss = loss - alpha[i] * (1.0 - pt[:, i]) ** gamma \
            * (t == i).astype(jnp.float32) * jnp.log(pt[:, i])
    return jnp.mean(loss) if reduction == "mean" else jnp.sum(loss)


if __name__ == "__main__":
    key = jax.random.PRNGKey(0)
    kx, kt = jax.random.split(key)

    # Primary check: module-default shapes (single-tile path).
    B, C, H, W = 2, 2, 16, 16
    x = jax.random.normal(kx, (B, C, H, W), dtype=jnp.float32)
    t = jax.random.randint(kt, (B, H, W), 0, C, dtype=jnp.int32)

    loss_mod = FocalLoss(gamma=2, alpha=[0.5, 0.5], n_class=2, reduction="mean")
    out = jax.block_until_ready(loss_mod(x, t))
    ref = _reference(x, t, 2, (0.5, 0.5), 2, "mean")
    assert jnp.allclose(out, ref, rtol=1e-5, atol=1e-6), (out, ref)

    # Secondary check: force a tiny tile to exercise multi-tile + tail masking.
    kx2, kt2 = jax.random.split(jax.random.PRNGKey(0), 2)
    B2, C2, H2, W2 = 2, 2, 10, 13          # hw = 130 -> tiles of 128 + masked tail
    x2 = jax.random.normal(kx2, (B2, C2, H2, W2), dtype=jnp.float32)
    t2 = jax.random.randint(kt2, (B2, H2, W2), 0, C2, dtype=jnp.int32)
    out2 = jax.block_until_ready(
        focal_loss(x2, t2, gamma=2, alpha=(0.25, 0.75), n_class=2,
                   reduction="sum", max_tile=128))
    ref2 = _reference(x2, t2, 2, (0.25, 0.75), 2, "sum")
    assert jnp.allclose(out2, ref2, rtol=1e-5, atol=1e-5), (out2, ref2)

    print("KERNEL_OK")
</pallas_src>

<mosaic_0001>
module attributes {stable_mosaic.version = 11 : i64} {
  func.func @_focal_loss_kernel(%arg0: i32, %arg1: i32, %arg2: memref<1x2x256xf32, #tpu.memory_space<vmem>>, %arg3: memref<1x1x256xi32, #tpu.memory_space<vmem>>, %arg4: memref<1x1x128xf32, #tpu.memory_space<vmem>>, %arg5: memref<1x256xf32, #tpu.memory_space<vmem>>) attributes {dimension_semantics = [#tpu.dimension_semantics<parallel>, #tpu.dimension_semantics<arbitrary>], iteration_bounds = array<i64: 2, 1>, scalar_prefetch = 0 : i64, scratch_operands = 1 : i64, tpu.core_type = #tpu.core_type<tc>, window_params = [{transform_indices = @transform_0, window_bounds = array<i64: 1, 2, 256>}, {transform_indices = @transform_1, window_bounds = array<i64: 1, 1, 256>}, {transform_indices = @transform_2, window_bounds = array<i64: 1, 1, 128>}]} {
    %c0_i32 = arith.constant 0 : i32
    %0 = arith.cmpi eq, %arg1, %c0_i32 : i32
    %1 = arith.extui %0 : i1 to i32
    %c0_i32_0 = arith.constant 0 : i32
    %2 = arith.cmpi ne, %1, %c0_i32_0 : i32
    scf.if %2 {
      %cst_27 = arith.constant 0.000000e+00 : f32
      %64 = vector.broadcast %cst_27 : f32 to vector<1x256xf32>
      %c0_28 = arith.constant 0 : index
      %c0_29 = arith.constant 0 : index
      %65 = vector.load %arg5[%c0_28, %c0_29] : memref<1x256xf32, #tpu.memory_space<vmem>>, vector<1x256xf32>
      tpu.vector_store %arg5[%c0_28, %c0_29], %64 {strides = array<i32>} : memref<1x256xf32, #tpu.memory_space<vmem>>, vector<1x256xf32>,
    } else {
    }
    %c0 = arith.constant 0 : index
    %c0_1 = arith.constant 0 : index
    %c0_2 = arith.constant 0 : index
    %3 = vector.load %arg2[%c0, %c0_1, %c0_2] : memref<1x2x256xf32, #tpu.memory_space<vmem>>, vector<1x2x256xf32>
    %4 = vector.shape_cast %3 : vector<1x2x256xf32> to vector<2x256xf32>
    %c0_3 = arith.constant 0 : index
    %c0_4 = arith.constant 0 : index
    %c0_5 = arith.constant 0 : index
    %5 = vector.load %arg3[%c0_3, %c0_4, %c0_5] : memref<1x1x256xi32, #tpu.memory_space<vmem>>, vector<1x1x256xi32>
    %6 = vector.shape_cast %5 : vector<1x1x256xi32> to vector<1x256xi32>
    %cst = arith.constant dense<0xFF800000> : vector<256xf32>
    %7 = vector.multi_reduction <maximumf>, %4, %cst [0] : vector<2x256xf32> to vector<256xf32>
    %8 = vector.shape_cast %7 : vector<256xf32> to vector<1x256xf32>
    %9 = vector.broadcast %8 : vector<1x256xf32> to vector<2x256xf32>
    %10 = arith.subf %4, %9 : vector<2x256xf32>
    %11 = math.exp %10 : vector<2x256xf32>
    %cst_6 = arith.constant dense<0.000000e+00> : vector<256xf32>
    %12 = vector.multi_reduction <add>, %11, %cst_6 [0] : vector<2x256xf32> to vector<256xf32>
    %13 = vector.shape_cast %12 : vector<256xf32> to vector<1x256xf32>
    %cst_7 = arith.constant 1.000000e+00 : f32
    %14 = vector.broadcast %cst_7 : f32 to vector<1x256xf32>
    %15 = arith.divf %14, %13 : vector<1x256xf32>
    %16 = math.log %13 : vector<1x256xf32>
    %17 = vector.broadcast %15 : vector<1x256xf32> to vector<2x256xf32>
    %18 = arith.mulf %11, %17 : vector<2x256xf32>
    %cst_8 = arith.constant 9.99999997E-7 : f32
    %cst_9 = arith.constant 0.999998986 : f32
    %19 = vector.broadcast %cst_8 : f32 to vector<2x256xf32>
    %20 = arith.maximumf %19, %18 : vector<2x256xf32>
    %21 = vector.broadcast %cst_9 : f32 to vector<2x256xf32>
    %22 = arith.minimumf %21, %20 : vector<2x256xf32>
    %23 = vector.broadcast %16 : vector<1x256xf32> to vector<2x256xf32>
    %24 = arith.subf %10, %23 : vector<2x256xf32>
    %cst_10 = arith.constant -13.8155107 : f32
    %cst_11 = arith.constant -1.00000045E-6 : f32
    %25 = vector.broadcast %cst_10 : f32 to vector<2x256xf32>
    %26 = arith.maximumf %25, %24 : vector<2x256xf32>
    %27 = vector.broadcast %cst_11 : f32 to vector<2x256xf32>
    %28 = arith.minimumf %27, %26 : vector<2x256xf32>
    %cst_12 = arith.constant 1.000000e+00 : f32
    %29 = vector.broadcast %cst_12 : f32 to vector<2x256xf32>
    %30 = arith.subf %29, %22 : vector<2x256xf32>
    %31 = arith.mulf %30, %30 : vector<2x256xf32>
    %32 = arith.mulf %31, %28 : vector<2x256xf32>
    %cst_13 = arith.constant 0.000000e+00 : f32
    %33 = vector.broadcast %cst_13 : f32 to vector<1x256xf32>
    %c0_i32_14 = arith.constant 0 : i32
    %34 = vector.broadcast %c0_i32_14 : i32 to vector<1x256xi32>
    %35 = arith.cmpi eq, %6, %34 : vector<1x256xi32>
    %36 = vector.extract_strided_slice %32 {offsets = [0, 0], sizes = [1, 256], strides = [1, 1]} : vector<2x256xf32> to vector<1x256xf32>
    %cst_15 = arith.constant -5.000000e-01 : f32
    %37 = vector.broadcast %cst_15 : f32 to vector<1x256xf32>
    %38 = arith.mulf %37, %36 : vector<1x256xf32>
    %cst_16 = arith.constant 0.000000e+00 : f32
    %39 = vector.broadcast %cst_16 : f32 to vector<1x256xf32>
    %40 = arith.select %35, %38, %39 : vector<1x256xi1>, vector<1x256xf32>
    %41 = arith.addf %33, %40 : vector<1x256xf32>
    %c1_i32 = arith.constant 1 : i32
    %42 = vector.broadcast %c1_i32 : i32 to vector<1x256xi32>
    %43 = arith.cmpi eq, %6, %42 : vector<1x256xi32>
    %44 = vector.extract_strided_slice %32 {offsets = [1, 0], sizes = [1, 256], strides = [1, 1]} : vector<2x256xf32> to vector<1x256xf32>
    %cst_17 = arith.constant -5.000000e-01 : f32
    %45 = vector.broadcast %cst_17 : f32 to vector<1x256xf32>
    %46 = arith.mulf %45, %44 : vector<1x256xf32>
    %cst_18 = arith.constant 0.000000e+00 : f32
    %47 = vector.broadcast %cst_18 : f32 to vector<1x256xf32>
    %48 = arith.select %43, %46, %47 : vector<1x256xi1>, vector<1x256xf32>
    %49 = arith.addf %41, %48 : vector<1x256xf32>
    %50 = tpu.iota {dimensions = array<i32: 1>} : vector<1x256xi32>
    %c256_i32 = arith.constant 256 : i32
    %51 = arith.muli %arg1, %c256_i32 : i32
    %52 = vector.broadcast %51 : i32 to vector<1x256xi32>
    %53 = arith.addi %50, %52 : vector<1x256xi32>
    %c256_i32_19 = arith.constant 256 : i32
    %54 = vector.broadcast %c256_i32_19 : i32 to vector<1x256xi32>
    %55 = arith.cmpi slt, %53, %54 : vector<1x256xi32>
    %cst_20 = arith.constant 0.000000e+00 : f32
    %56 = vector.broadcast %cst_20 : f32 to vector<1x256xf32>
    %57 = arith.select %55, %49, %56 : vector<1x256xi1>, vector<1x256xf32>
    %c0_21 = arith.constant 0 : index
    %c0_22 = arith.constant 0 : index
    %58 = vector.load %arg5[%c0_21, %c0_22] : memref<1x256xf32, #tpu.memory_space<vmem>>, vector<1x256xf32>
    %59 = arith.addf %58, %57 : vector<1x256xf32>
    %c0_23 = arith.constant 0 : index
    %c0_24 = arith.constant 0 : index
    %60 = vector.load %arg5[%c0_23, %c0_24] : memref<1x256xf32, #tpu.memory_space<vmem>>, vector<1x256xf32>
    tpu.vector_store %arg5[%c0_23, %c0_24], %59 {strides = array<i32>} : memref<1x256xf32, #tpu.memory_space<vmem>>, vector<1x256xf32>,
    %c0_i32_25 = arith.constant 0 : i32
    %61 = arith.cmpi eq, %arg1, %c0_i32_25 : i32
    %62 = arith.extui %61 : i1 to i32
    %c0_i32_26 = arith.constant 0 : i32
    %63 = arith.cmpi ne, %62, %c0_i32_26 : i32
    scf.if %63 {
      %c0_27 = arith.constant 0 : index
      %c0_28 = arith.constant 0 : index
      %64 = vector.load %arg5[%c0_27, %c0_28] : memref<1x256xf32, #tpu.memory_space<vmem>>, vector<1x256xf32>
      %65 = vector.shape_cast %64 : vector<1x256xf32> to vector<1x1x256xf32>
      %cst_29 = arith.constant dense<0.000000e+00> : vector<1xf32>
      %66 = vector.multi_reduction <add>, %65, %cst_29 [1, 2] : vector<1x1x256xf32> to vector<1xf32>
      %67 = vector.shape_cast %66 : vector<1xf32> to vector<1x1x1xf32>
      %68 = vector.extract %67[0, 0, 0] : f32 from vector<1x1x1xf32>
      %69 = vector.broadcast %68 : f32 to vector<1x1x128xf32>
      %c0_30 = arith.constant 0 : index
      %c0_31 = arith.constant 0 : index
      %c0_32 = arith.constant 0 : index
      %70 = vector.load %arg4[%c0_30, %c0_31, %c0_32] : memref<1x1x128xf32, #tpu.memory_space<vmem>>, vector<1x1x128xf32>
      tpu.vector_store %arg4[%c0_30, %c0_31, %c0_32], %69 {strides = array<i32>} : memref<1x1x128xf32, #tpu.memory_space<vmem>>, vector<1x1x128xf32>,
    } else {
    }
    return
  }
  func.func @transform_0(%arg0: i32, %arg1: i32) -> (i32, i32, i32) {
    %c0_i32 = arith.constant 0 : i32
    %c0_i32_0 = arith.constant 0 : i32
    return %arg0, %c0_i32, %arg1 : i32, i32, i32
  }
  func.func @transform_1(%arg0: i32, %arg1: i32) -> (i32, i32, i32) {
    %c0_i32 = arith.constant 0 : i32
    %c0_i32_0 = arith.constant 0 : i32
    return %arg0, %c0_i32, %arg1 : i32, i32, i32
  }
  func.func @transform_2(%arg0: i32, %arg1: i32) -> (i32, i32, i32) {
    %c0_i32 = arith.constant 0 : i32
    %c0_i32_0 = arith.constant 0 : i32
    %c0_i32_1 = arith.constant 0 : i32
    return %arg0, %c0_i32, %c0_i32_0 : i32, i32, i32
  }
}

</mosaic_0001>

<llo_original>
// kernel: tpu_custom_call.1
$region0: #{tpu_custom_call.1}
  #allocation0 [shape = 'u32[]', space=smem, size = 0x4, offset = 0x4, fixed_abs, tag = 'smem constant byte address 0x4 - core index']
  #allocation1 [shape = 'u32[144,128]{1,0:T(1,128)}', space=vmem, size = 0x12000, scoped, tag = 'internal scratch']
  #allocation2 [shape = 'f32[1,256]{1,0:T(1,128)}', space=vmem, size = 0x400, scoped, tag = 'scratch operand']
  %s0 = inlined_call_operand.hbm [shape: f32[2,2,256], index: 0, kind: input, shape index: {}]
  %s1 = inlined_call_operand.hbm [shape: s32[2,1,256], index: 1, kind: input, shape index: {}]
  %s2 = inlined_call_operand.hbm [shape: f32[2,1,128], index: 2, kind: output, shape index: {}]
  %s3 = sld [smem:[#allocation0]]
  $region57: #{tpu_custom_call.1} parent=0
    _
  %s5 = ssub.s32 1, %s3
  %s6 = scalar_select 0, %s5, %s3
  $region1: #{tpu_custom_call.1} parent=0
    #allocation3 [shape = 'u8[4096]{0}', space=vmem, size = 0x1000, scoped, tag = 'input window, operand 0']
    #allocation4 [shape = 's32[2]{0}', space=sflag, size = 0x8, scoped, tag = 'scoped memory for tpu_custom_call.1']
    #allocation5 [shape = 's32[2]{0}', space=sflag, size = 0x8, scoped, tag = 'scoped memory for tpu_custom_call.1']
    #allocation6 [shape = 'u8[2048]{0}', space=vmem, size = 0x800, scoped, tag = 'input window, operand 1']
    #allocation7 [shape = 's32[2]{0}', space=sflag, size = 0x8, scoped, tag = 'scoped memory for tpu_custom_call.1']
    #allocation8 [shape = 'u8[1024]{0}', space=vmem, size = 0x400, scoped, tag = 'output window, operand 0']
    %7 = vsyncpa [#allocation4], 0
    %s8 = scalar_lea.sflag [#allocation4], 1
    %9 = vsyncpa %s8, 0
    %10 = vsyncpa [#allocation7], 0
    %s11 = scalar_lea.sflag [#allocation7], 1
    %12 = vsyncpa %s11, 0
    %13 = vsyncpa [#allocation5], 0
    %s14 = scalar_lea.sflag [#allocation5], 1
    %15 = vsyncpa %s14, 0
    loop: start=0, step=1, limit=4
    $region2: #{tpu_custom_call.1} parent=1 // loop_pre_header
      _
    $region3: #{tpu_custom_call.1} parent=1 // loop_header
      %s17 = sphi 0, %s21
      %p18 = scmp.ge.s32.totalorder %s17, 4
      %s24 = sphi 0, %s36
      %s25 = sphi 0, %s32
      %s26 = sphi 0, %s24
      %s27 = sphi 0, %s25
      %s28 = sphi 0, %s26
      %s29 = sphi 0, %s27
      %s41 = sphi 0, %s43
      %s44 = sphi 0, %s41
      %s45 = sphi 0, %s44
      %s61 = sphi 0, %s45
      %s69 = sphi 0, %s71
      %s72 = sphi 0, %s69
      %s73 = sphi 0, %s72
      %s89 = sphi 0, %s73
      %s95 = sphi 0, %s97
      %s98 = sphi 0, %s95
      %s99 = sphi 0, %s98
      %s115 = sphi 0, %s99
    $region4: #{tpu_custom_call.1} parent=1 // loop_header_branch
      %20 = sbr.rel (%p18) target = $region8
    $region5: #{tpu_custom_call.1} parent=1 // loop_body
      %s22 = ssub.s32 %s17, 1
      %s23 = ssub.s32 %s17, 2
      %s30 = sadd.s32 1, %s25
      %p31 = scmp.ge.s32.totalorder %s30, 1
      %s32 = scalar_select %p31, 0, %s30
      %s33 = sadd.s32 1, %s24
      %s34 = scalar_select %p31, %s33, %s24
      %p35 = scmp.ge.s32.totalorder %s34, 2
      %s36 = scalar_select %p35, 0, %s34
      %s37 = ssub.s32 %s24, %s36
      %s38 = ssub.s32 %s25, %s32
      %s39 = sor.u32 %s37, %s38
      %p40 = scmp.eq.s32.totalorder %s39, 0
      %s42 = sadd.s32 %s41, 1
      %s43 = scalar_select %p40, %s41, %s42
      %p46 = pneg %p40
      %p47 = scmp.eq.s32.totalorder %s17, 1
      %p48 = por %p46, %p47
      %p49 = scmp.ne.s32.totalorder %s41, %s44
      %p50 = scmp.eq.s32.totalorder %s17, 0
      %p51 = por %p49, %p50
      %p52 = scmp.ne.s32.totalorder %s41, %s44
      %p53 = scmp.eq.s32.totalorder %s22, 1
      %p54 = por %p52, %p53
      %p55 = scmp.ne.s32.totalorder %s44, %s45
      %p56 = scmp.eq.s32.totalorder %s22, 0
      %p57 = por %p55, %p56
      %p58 = scmp.ne.s32.totalorder %s44, %s45
      %p59 = scmp.eq.s32.totalorder %s23, 1
      %p60 = por %p58, %p59
      %p62 = scmp.ne.s32.totalorder %s45, %s61
      %p63 = scmp.eq.s32.totalorder %s23, 0
      %p64 = por %p62, %p63
      %s65 = ssub.s32 %s24, %s36
      %s66 = ssub.s32 %s25, %s32
      %s67 = sor.u32 %s65, %s66
      %p68 = scmp.eq.s32.totalorder %s67, 0
      %s70 = sadd.s32 %s69, 1
      %s71 = scalar_select %p68, %s69, %s70
      %p74 = pneg %p68
      %p75 = scmp.eq.s32.totalorder %s17, 1
      %p76 = por %p74, %p75
      %p77 = scmp.ne.s32.totalorder %s69, %s72
      %p78 = scmp.eq.s32.totalorder %s17, 0
      %p79 = por %p77, %p78
      %p80 = scmp.ne.s32.totalorder %s69, %s72
      %p81 = scmp.eq.s32.totalorder %s22, 1
      %p82 = por %p80, %p81
      %p83 = scmp.ne.s32.totalorder %s72, %s73
      %p84 = scmp.eq.s32.totalorder %s22, 0
      %p85 = por %p83, %p84
      %p86 = scmp.ne.s32.totalorder %s72, %s73
      %p87 = scmp.eq.s32.totalorder %s23, 1
      %p88 = por %p86, %p87
      %p90 = scmp.ne.s32.totalorder %s73, %s89
      %p91 = scmp.eq.s32.totalorder %s23, 0
      %p92 = por %p90, %p91
      %s93 = ssub.s32 %s24, %s36
      %p94 = scmp.eq.s32.totalorder %s93, 0
      %s96 = sadd.s32 %s95, 1
      %s97 = scalar_select %p94, %s95, %s96
      %p100 = pneg %p94
      %p101 = scmp.eq.s32.totalorder %s17, 1
      %p102 = por %p100, %p101
      %p103 = scmp.ne.s32.totalorder %s95, %s98
      %p104 = scmp.eq.s32.totalorder %s17, 0
      %p105 = por %p103, %p104
      %p106 = scmp.ne.s32.totalorder %s95, %s98
      %p107 = scmp.eq.s32.totalorder %s22, 1
      %p108 = por %p106, %p107
      %p109 = scmp.ne.s32.totalorder %s98, %s99
      %p110 = scmp.eq.s32.totalorder %s22, 0
      %p111 = por %p109, %p110
      %p112 = scmp.ne.s32.totalorder %s98, %s99
      %p113 = scmp.eq.s32.totalorder %s23, 1
      %p114 = por %p112, %p113
      %p116 = scmp.ne.s32.totalorder %s99, %s115
      %p117 = scmp.eq.s32.totalorder %s23, 0
      %p118 = por %p116, %p117
      %p119 = scmp.le.s32.totalorder 1, %s17
      %p120 = scmp.lt.s32.totalorder %s17, 3
      %p121 = pnand %p119, %p120
      %p122 = pneg %p121
      // Predicated region
      $region9: #{tpu_custom_call.1} parent=5 // pred_check
        _
      $region10: #{tpu_custom_call.1} parent=5 // pred_check_branch
        %124 = sbr.rel (%p121) target = $region12
      $region11: #{tpu_custom_call.1} parent=5 // pred_region
        %s125 = ssub.s32 %s17, 1
      $region12: #{tpu_custom_call.1} parent=5 // pred_fallthru
        _
      %p126 = scmp.lt.s32.totalorder %s17, 2
      // Predicated region
      $region13: #{tpu_custom_call.1} parent=5 // pred_check
        %p127 = pneg %p126
      $region14: #{tpu_custom_call.1} parent=5 // pred_check_branch
        %129 = sbr.rel (%p127) target = $region16
      $region15: #{tpu_custom_call.1} parent=5 // pred_region
        // Predicated region
        $region17: #{tpu_custom_call.1} parent=15 // pred_check
          %p130 = pneg %p51
        $region18: #{tpu_custom_call.1} parent=15 // pred_check_branch
          %132 = sbr.rel (%p130) target = $region20
        $region19: #{tpu_custom_call.1} parent=15 // pred_region
          %s133 = sand.u32 %s41, 1
          %s134 = scalar_lea.sflag [#allocation4], %s133
          %s135 = sand.u32 %s41, 1
          %s136 = smul.addr %s135, 4
          %s137 = scalar_lea.vmem [#allocation3], %s136
          %s138 = smul.u32 2, %s25
          %s140 = ssub.s32 64, 64
          %141 = vsyncadd %s134, %s140
          %s142 = smul.addr %s24, 2
          %s143 = sadd.s32 %s138, %s142
          %s144 = smul.addr %s143, 32
          %s145 = scalar_lea.hbm %s0, %s144
          %s147 = sshll.u32 %s137, 4
          %s148 = int_to_ptr.vmem [resolvable:$true] %s147
          %150 = dma.hbm_to_vmem [thread:$0]  %s145, 64, %s148, %s134
        $region20: #{tpu_custom_call.1} parent=15 // pred_fallthru
          _
        // Predicated region
        $region21: #{tpu_custom_call.1} parent=15 // pred_check
          %p151 = pneg %p79
        $region22: #{tpu_custom_call.1} parent=15 // pred_check_branch
          %153 = sbr.rel (%p151) target = $region24
        $region23: #{tpu_custom_call.1} parent=15 // pred_region
          %s154 = sand.u32 %s69, 1
          %s155 = scalar_lea.sflag [#allocation7], %s154
          %s156 = sand.u32 %s69, 1
          %s157 = smul.addr %s156, 2
          %s158 = scalar_lea.vmem [#allocation6], %s157
          %s159 = smul.u32 2, %s25
          %s161 = ssub.s32 32, 32
          %162 = vsyncadd %s155, %s161
          %s163 = smul.addr %s24, 2
          %s164 = sadd.s32 %s159, %s163
          %s165 = smul.addr %s164, 16
          %s166 = scalar_lea.hbm %s1, %s165
          %s168 = sshll.u32 %s158, 4
          %s169 = int_to_ptr.vmem [resolvable:$true] %s168
          %171 = dma.hbm_to_vmem [thread:$0]  %s166, 32, %s169, %s155
        $region24: #{tpu_custom_call.1} parent=15 // pred_fallthru
          _
      $region16: #{tpu_custom_call.1} parent=5 // pred_fallthru
        _
      %p172 = scmp.le.s32.totalorder 1, %s17
      %p173 = scmp.lt.s32.totalorder %s17, 3
      %p174 = pnand %p172, %p173
      %p175 = pneg %p174
      // Predicated region
      $region25: #{tpu_custom_call.1} parent=5 // pred_check
        _
      $region26: #{tpu_custom_call.1} parent=5 // pred_check_branch
        %177 = sbr.rel (%p174) target = $region28
      $region27: #{tpu_custom_call.1} parent=5 // pred_region
        %s178 = ssub.s32 %s17, 1
        %s179 = sand.u32 %s44, 1
        %s180 = scalar_lea.sflag [#allocation4], %s179
        %s181 = sand.u32 %s44, 1
        %s182 = smul.addr %s181, 4
        %s183 = scalar_lea.vmem [#allocation3], %s182
        // Predicated region
        $region29: #{tpu_custom_call.1} parent=27 // pred_check
          %p184 = pneg %p57
        $region30: #{tpu_custom_call.1} parent=27 // pred_check_branch
          %186 = sbr.rel (%p184) target = $region32
        $region31: #{tpu_custom_call.1} parent=27 // pred_region
          %187 = dma.done %s180, 64
        $region32: #{tpu_custom_call.1} parent=27 // pred_fallthru
          _
        %s188 = sand.u32 %s72, 1
        %s189 = scalar_lea.sflag [#allocation7], %s188
        %s190 = sand.u32 %s72, 1
        %s191 = smul.addr %s190, 2
        %s192 = scalar_lea.vmem [#allocation6], %s191
        // Predicated region
        $region33: #{tpu_custom_call.1} parent=27 // pred_check
          %p193 = pneg %p85
        $region34: #{tpu_custom_call.1} parent=27 // pred_check_branch
          %195 = sbr.rel (%p193) target = $region36
        $region35: #{tpu_custom_call.1} parent=27 // pred_region
          %196 = dma.done %s189, 32
        $region36: #{tpu_custom_call.1} parent=27 // pred_fallthru
          _
        %s197 = sand.u32 %s44, 1
        %s198 = scalar_lea.sflag [#allocation4], %s197
        %s199 = sand.u32 %s44, 1
        %s200 = smul.addr %s199, 4
        %s201 = scalar_lea.vmem [#allocation3], %s200
        %p202 = pneg %p57
        %p203 = pneg %p54
        %s204 = sand.u32 %s72, 1
        %s205 = scalar_lea.sflag [#allocation7], %s204
        %s206 = sand.u32 %s72, 1
        %s207 = smul.addr %s206, 2
        %s208 = scalar_lea.vmem [#allocation6], %s207
        %p209 = pneg %p85
        %p210 = pneg %p82
        %p211 = pneg %p111
        %p212 = pneg %p108
        %s213 = sand.u32 %s98, 1
        %s214 = scalar_lea.sflag [#allocation5], %s213
        %s215 = sand.u32 %s98, 1
        %s216 = scalar_lea.vmem [#allocation8], %s215
        %s217 = smul.u32 2, %s27
        %s218 = smul.u32 2, %s27
        %p219 = scmp.eq.s32.totalorder %s27, 0
        // Predicated region
        $region37: #{tpu_custom_call.1} parent=27 // pred_check
          %p220 = pneg %p219
        $region38: #{tpu_custom_call.1} parent=27 // pred_check_branch
          %222 = sbr.rel (%p220) target = $region40
        $region39: #{tpu_custom_call.1} parent=27 // pred_region
          %v223 = vlaneseq
          %vm224 = vcmp.ge.s32.totalorder %v223, 0
          %vm225 = vcmp.lt.s32.totalorder %v223, 256
          %vm226 = vmand %vm224, %vm225
          %227 = vst.msk [vmem:[#allocation2] sm:$0x3] %vm226, 0.0
        $region40: #{tpu_custom_call.1} parent=27 // pred_fallthru
          _
        %v228 = vld [vmem:[%s183] sm:$0xf]
        %v229 = vld [vmem:[%s192] sm:$0x3]
        %v232 = vunpack.c.l.s4 1983009808
        %v233 = vunpack.c.0.s8 %v232
        %v234 = vlaneseq
        %v235 = vshrl.u32 %v234, 7
        %v236 = vsub.s32 %v233, %v235
        %v237 = vrot.slane %v228, %v236
        %v238 = vcombine.high %v237, %v237
        %vm241 = vcmask 1041408
        %v242 = vsel %vm241, %v237, -inf
        %v243 = vrot.slane %v242, 4
        %v244 = vmax.f32 %v242, %v243
        %v245 = vrot.slane %v244, 2
        %v246 = vmax.f32 %v244, %v245
        %v247 = vrot.slane %v246, 1
        %v248 = vmax.f32 %v246, %v247
        %v249 = vsel %vm241, %v238, -inf
        %v250 = vrot.slane %v249, 4
        %v251 = vmax.f32 %v249, %v250
        %v252 = vrot.slane %v251, 2
        %v253 = vmax.f32 %v251, %v252
        %v254 = vrot.slane %v253, 1
        %v255 = vmax.f32 %v253, %v254
        %v258 = vcombine.low %v248, %v255
        %v260 = vunpack.c.l.s4 1983009808
        %v261 = vunpack.c.0.s8 %v260
        %v262 = vlaneseq
        %v263 = vshrl.u32 %v262, 7
        %v264 = vsub.s32 %v261, %v263
        %v265 = vrot.slane %v258, %v264
        %v267 = vsub.f32 %v228, %v265
        %v268 = vmul.f32 %v267, 1.442695
        %v269 = vpow.pop %v268
        %v272 = vunpack.c.l.s4 1983009808
        %v273 = vunpack.c.0.s8 %v272
        %v274 = vlaneseq
        %v275 = vshrl.u32 %v274, 7
        %v276 = vsub.s32 %v273, %v275
        %v277 = vrot.slane %v269, %v276
        %v278 = vcombine.high %v277, %v277
        %v281 = vsel %vm241, %v277, 0.0
        %v282 = vrot.slane %v281, 4
        %v283 = vadd.f32 %v281, %v282
        %v284 = vrot.slane %v283, 2
        %v285 = vadd.f32 %v283, %v284
        %v286 = vrot.slane %v285, 1
        %v287 = vadd.f32 %v285, %v286
        %v288 = vsel %vm241, %v278, 0.0
        %v289 = vrot.slane %v288, 4
        %v290 = vadd.f32 %v288, %v289
        %v291 = vrot.slane %v290, 2
        %v292 = vadd.f32 %v290, %v291
        %v293 = vrot.slane %v292, 1
        %v294 = vadd.f32 %v292, %v293
        %v295 = vrcp.pop %v287
        %v296 = vmul.f32 1.0, %v295
        %v297 = vrcp.pop %v294
        %v298 = vmul.f32 1.0, %v297
        %v299 = vlog2.pop %v287
        %v300 = vmul.f32 %v299, 0.6931472
        %v301 = vlog2.pop %v294
        %v302 = vmul.f32 %v301, 0.6931472
        %v305 = vcombine.low %v296, %v298
        %v307 = vunpack.c.l.s4 1983009808
        %v308 = vunpack.c.0.s8 %v307
        %v309 = vlaneseq
        %v310 = vshrl.u32 %v309, 7
        %v311 = vsub.s32 %v308, %v310
        %v312 = vrot.slane %v305, %v311
        %v314 = vmul.f32 %v269, %v312
        %v315 = vmax.f32 %v314, 1e-06
        %v316 = vmin.f32 %v315, 0.999999
        %v319 = vcombine.low %v300, %v302
        %v321 = vunpack.c.l.s4 1983009808
        %v322 = vunpack.c.0.s8 %v321
        %v323 = vlaneseq
        %v324 = vshrl.u32 %v323, 7
        %v325 = vsub.s32 %v322, %v324
        %v326 = vrot.slane %v319, %v325
        %v328 = vsub.f32 %v267, %v326
        %v329 = vmax.f32 %v328, -13.815511
        %v330 = vmin.f32 %v329, -1.0000005e-06
        %v331 = vsub.f32 1.0, %v316
        %v332 = vmul.f32 %v331, %v331
        %v333 = vmul.f32 %v332, %v330
        %vm334 = vcmp.eq.s32.totalorder %v229, 0
        %v335 = vmul.f32 %v333, -0.5
        %v338 = vunpack.c.l.s4 1966171168
        %v339 = vunpack.c.0.s8 %v338
        %v340 = vlaneseq
        %v341 = vshrl.u32 %v340, 7
        %v342 = vsub.s32 %v339, %v341
        %v343 = vrot.slane %v335, %v342
        %v345 = vsel %vm334, %v343, 0.0
        %v346 = vadd.f32 %v345, 0.0
        %vm347 = vcmp.eq.s32.totalorder %v229, 1
        %v348 = vcombine.high %v343, %v343
        %v350 = vsel %vm347, %v348, 0.0
        %v351 = vadd.f32 %v346, %v350
        %v352 = vlaneseq
        %v353 = vand.u32 %v352, 127
        %v354 = vadd.s32 %v353, 128
        %s355 = smul.u32 %s27, 256
        %v356 = vstv %s355
        %v357 = vadd.s32 %v353, %v356
        %v358 = vadd.s32 %v354, %v356
        %vm359 = vcmp.lt.s32.totalorder %v357, 256
        %vm360 = vcmp.lt.s32.totalorder %v358, 256
        %v362 = vlaneseq
        %v363 = vshrl.u32 %v362, 7
        %v364 = vsub.s32 0, %v363
        %v365 = vrot.slane %v351, %v364
        %v366 = vlaneseq
        %v367 = vshrl.u32 %v366, 7
        %v368 = vsub.s32 1, %v367
        %v369 = vrot.slane %v351, %v368
        %v372 = vsel %vm359, %v365, 0.0
        %v373 = vsel %vm360, %v369, 0.0
        %v374 = vld [vmem:[#allocation2] sm:$0x3]
        %v377 = vcombine.low %v372, %v373
        %v379 = vunpack.c.l.s4 1966171168
        %v380 = vunpack.c.0.s8 %v379
        %v381 = vlaneseq
        %v382 = vshrl.u32 %v381, 7
        %v383 = vsub.s32 %v380, %v382
        %v384 = vrot.slane %v377, %v383
        %v386 = vunpack.c.l.s4 1966171168
        %v387 = vunpack.c.0.s8 %v386
        %v388 = vlaneseq
        %v389 = vshrl.u32 %v388, 7
        %v390 = vsub.s32 %v387, %v389
        %v391 = vrot.slane %v384, %v390
        %v393 = vadd.f32 %v374, %v391
        %v394 = vlaneseq
        %vm395 = vcmp.ge.s32.totalorder %v394, 0
        %vm396 = vcmp.lt.s32.totalorder %v394, 256
        %vm397 = vmand %vm395, %vm396
        %398 = vst.msk [vmem:[#allocation2] sm:$0x3] %vm397, %v393
        // Predicated region
        $region41: #{tpu_custom_call.1} parent=27 // pred_check
          %p399 = pneg %p219
        $region42: #{tpu_custom_call.1} parent=27 // pred_check_branch
          %401 = sbr.rel (%p399) target = $region44
        $region43: #{tpu_custom_call.1} parent=27 // pred_region
          %v402 = vld [vmem:[#allocation2] sm:$0x3]
          %v404 = vlaneseq
          %v405 = vshrl.u32 %v404, 7
          %v406 = vsub.s32 0, %v405
          %v407 = vrot.slane %v402, %v406
          %v408 = vlaneseq
          %v409 = vshrl.u32 %v408, 7
          %v410 = vsub.s32 1, %v409
          %v411 = vrot.slane %v402, %v410
          %vm414 = vcmask 1040384
          %v415 = vsel %vm414, %v407, 0.0
          %v416 = vsel %vm414, %v411, 0.0
          %v417 = vadd.f32 %v415, %v416
          %418 = vadd.xlane.f32.xlu0 %v417
          %v419 = vpop.xlane.xlu0 %418
          %v420 = vrot.slane %v419, 4
          %v421 = vadd.f32 %v419, %v420
          %v422 = vrot.slane %v421, 2
          %v423 = vadd.f32 %v421, %v422
          %v424 = vrot.slane %v423, 1
          %v425 = vadd.f32 %v423, %v424
          %s426 = vtos %v425
          %v427 = vstv %s426
          %428 = vst [vmem:[%s216] sm:$0x1] %v427
        $region44: #{tpu_custom_call.1} parent=27 // pred_fallthru
          _
        %s429 = sand.u32 %s98, 1
        %s430 = scalar_lea.sflag [#allocation5], %s429
        %s431 = sand.u32 %s98, 1
        %s432 = scalar_lea.vmem [#allocation8], %s431
        // Predicated region
        $region45: #{tpu_custom_call.1} parent=27 // pred_check
          %p433 = pneg %p108
        $region46: #{tpu_custom_call.1} parent=27 // pred_check_branch
          %435 = sbr.rel (%p433) target = $region48
        $region47: #{tpu_custom_call.1} parent=27 // pred_region
          %s437 = ssub.s32 16, 16
          %438 = vsyncadd %s430, %s437
          %s439 = smul.addr %s26, 16
          %s440 = scalar_lea.hbm %s2, %s439
          %s442 = sshll.u32 %s432, 4
          %s443 = int_to_ptr.vmem [resolvable:$true] %s442
          %445 = dma.vmem_to_hbm [thread:$0]  %s443, 16, %s440, %s430
        $region48: #{tpu_custom_call.1} parent=27 // pred_fallthru
          _
      $region28: #{tpu_custom_call.1} parent=5 // pred_fallthru
        _
      %p446 = scmp.le.s32.totalorder 2, %s17
      // Predicated region
      $region49: #{tpu_custom_call.1} parent=5 // pred_check
        %p447 = pneg %p446
      $region50: #{tpu_custom_call.1} parent=5 // pred_check_branch
        %449 = sbr.rel (%p447) target = $region52
      $region51: #{tpu_custom_call.1} parent=5 // pred_region
        %s450 = ssub.s32 %s17, 2
        // Predicated region
        $region53: #{tpu_custom_call.1} parent=51 // pred_check
          %p451 = pneg %p114
        $region54: #{tpu_custom_call.1} parent=51 // pred_check_branch
          %453 = sbr.rel (%p451) target = $region56
        $region55: #{tpu_custom_call.1} parent=51 // pred_region
          %s454 = sand.u32 %s99, 1
          %s455 = scalar_lea.sflag [#allocation5], %s454
          %s456 = sand.u32 %s99, 1
          %s457 = scalar_lea.vmem [#allocation8], %s456
          %458 = dma.done %s455, 16
        $region56: #{tpu_custom_call.1} parent=51 // pred_fallthru
          _
      $region52: #{tpu_custom_call.1} parent=5 // pred_fallthru
        _
    $region6: #{tpu_custom_call.1} parent=1 // loop_footer
      %s21 = sadd.s32 1, %s17
    $region7: #{tpu_custom_call.1} parent=1 // loop_footer_branch
      %16 = sbr.rel target = $region3
    $region8: #{tpu_custom_call.1} parent=1 // loop_exit
      _
    %459 = vsyncpa [#allocation4], 1
    %s460 = scalar_lea.sflag [#allocation4], 1
    %461 = vsyncpa %s460, 1
    %462 = vsyncpa [#allocation7], 1
    %s463 = scalar_lea.sflag [#allocation7], 1
    %464 = vsyncpa %s463, 1
    %465 = vsyncpa [#allocation5], 1
    %s466 = scalar_lea.sflag [#allocation5], 1
    %467 = vsyncpa %s466, 1

</llo_original>
